<compile_context>
chip_gen: v5e
topology: v5e:2x2
jax: 0.10.0
libtpu: 0.0.40
codegen_flags: <defaults>
</compile_context>

<pallas_src>
import functools

import jax
import jax.numpy as jnp
from jax.experimental import pallas as pl
from jax.experimental.pallas import tpu as pltpu

LANES = 128


def _huber_elementwise(p, t, delta):
    p = p.astype(jnp.float32)
    t = t.astype(jnp.float32)
    abs_err = jnp.abs(p - t)
    quad = jnp.minimum(abs_err, jnp.float32(delta))
    lin = abs_err - quad
    return 0.5 * quad * quad + jnp.float32(delta) * lin


def _huber_single_kernel(pred_ref, true_ref, out_ref, *, delta, n_total):
    # Whole array in one block: compute the mean directly, no accumulator.
    loss = _huber_elementwise(pred_ref[...], true_ref[...], delta)
    out_ref[...] = (jnp.sum(loss) / jnp.float32(n_total)).reshape(1, 1)


def _huber_partial_kernel(pred_ref, true_ref, out_ref, *, delta, block_rows,
                          rows, need_mask):
    # One big block per grid step -> lane-dense (8, 128) partial sum.
    loss = _huber_elementwise(pred_ref[...], true_ref[...], delta)
    if need_mask:
        # Ragged last block: zero out rows beyond the true extent (instead of
        # padding the inputs in HBM).
        i = pl.program_id(0)
        row_ids = i * block_rows + jax.lax.broadcasted_iota(
            jnp.int32, loss.shape, 0)
        loss = jnp.where(row_ids < rows, loss, jnp.float32(0.0))
    # Sublane fold: (block_rows, 128) -> (block_rows//8, 8, 128) -> (8, 128).
    out_ref[...] = loss.reshape(block_rows // 8, 8, LANES).sum(axis=0)


def huber_loss(y_pred, y_true, delta=1.0, *, tile_rows=2048):
    assert y_pred.shape == y_true.shape
    assert tile_rows % 8 == 0
    n_total = y_pred.size

    flat_p = jnp.ravel(y_pred)
    flat_t = jnp.ravel(y_true)
    rem = n_total % LANES
    if rem:
        # Tiny (<128 elem) zero pad just to make the slab lane-divisible.
        # Zero pred/true pairs contribute zero Huber loss; we divide by the
        # true n_total, so the result is exact.
        pad = LANES - rem
        flat_p = jnp.concatenate([flat_p, jnp.zeros((pad,), flat_p.dtype)])
        flat_t = jnp.concatenate([flat_t, jnp.zeros((pad,), flat_t.dtype)])
    rows = flat_p.size // LANES
    p2 = flat_p.reshape(rows, LANES)
    t2 = flat_t.reshape(rows, LANES)

    if rows <= tile_rows:
        # ---- small path: single block, no pipeline / accumulator overhead ----
        kernel = functools.partial(
            _huber_single_kernel, delta=float(delta), n_total=float(n_total))
        out = pl.pallas_call(
            kernel,
            out_shape=jax.ShapeDtypeStruct((1, 1), jnp.float32),
            grid_spec=pltpu.PrefetchScalarGridSpec(
                num_scalar_prefetch=0,
                grid=(1,),
                in_specs=[
                    pl.BlockSpec((rows, LANES), lambda i: (0, 0)),
                    pl.BlockSpec((rows, LANES), lambda i: (0, 0)),
                ],
                out_specs=pl.BlockSpec((1, 1), lambda i: (0, 0)),
            ),
            compiler_params=pltpu.CompilerParams(
                dimension_semantics=("arbitrary",)),
        )(p2, t2)
        return out[0, 0]

    # ---- large path: big blocks, per-block partial sums, parallel grid ----
    nb = pl.cdiv(rows, tile_rows)
    need_mask = (rows % tile_rows) != 0
    kernel = functools.partial(
        _huber_partial_kernel, delta=float(delta), block_rows=tile_rows,
        rows=rows, need_mask=need_mask)
    partials = pl.pallas_call(
        kernel,
        out_shape=jax.ShapeDtypeStruct((nb * 8, LANES), jnp.float32),
        grid_spec=pltpu.PrefetchScalarGridSpec(
            num_scalar_prefetch=0,
            grid=(nb,),
            in_specs=[
                pl.BlockSpec((tile_rows, LANES), lambda i: (i, 0)),
                pl.BlockSpec((tile_rows, LANES), lambda i: (i, 0)),
            ],
            out_specs=pl.BlockSpec((8, LANES), lambda i: (i, 0)),
        ),
        compiler_params=pltpu.CompilerParams(
            dimension_semantics=("parallel",)),
    )(p2, t2)
    # Tiny final reduction + mean in plain JAX.
    return jnp.sum(partials) / jnp.float32(n_total)


def _huber_ref(y_pred, y_true, delta=1.0):
    abs_err = jnp.abs(y_pred.astype(jnp.float32) - y_true.astype(jnp.float32))
    quad = jnp.minimum(abs_err, delta)
    lin = abs_err - quad
    return jnp.mean(0.5 * quad**2 + delta * lin)


if __name__ == "__main__":
    key = jax.random.PRNGKey(0)
    k1, k2, k3, k4 = jax.random.split(key, 4)

    # NCHW-shaped predictions / targets (matches the PyTorch module's usage).
    y_pred = jax.random.normal(k1, (2, 4, 16, 16), dtype=jnp.float32) * 2.0
    y_true = jax.random.normal(k2, (2, 4, 16, 16), dtype=jnp.float32)

    # Primary (default, single-block) path.
    loss = huber_loss(y_pred, y_true, delta=1.0)
    jax.block_until_ready(loss)
    ref = _huber_ref(y_pred, y_true, delta=1.0)
    assert jnp.allclose(loss, ref, atol=1e-5, rtol=1e-5), (loss, ref)

    # Exercise the multi-block partial-sum path at small scale (tile override).
    loss_mb = huber_loss(y_pred, y_true, delta=1.0, tile_rows=8)
    jax.block_until_ready(loss_mb)
    assert jnp.allclose(loss_mb, ref, atol=1e-5, rtol=1e-5), (loss_mb, ref)

    # Exercise the ragged-last-block (in-kernel mask) path.
    y_pred2 = jax.random.normal(k3, (2, 4, 16, 20), dtype=jnp.float32)
    y_true2 = jax.random.normal(k4, (2, 4, 16, 20), dtype=jnp.float32)
    loss_rg = huber_loss(y_pred2, y_true2, delta=1.0, tile_rows=8)
    jax.block_until_ready(loss_rg)
    ref2 = _huber_ref(y_pred2, y_true2, delta=1.0)
    assert jnp.allclose(loss_rg, ref2, atol=1e-5, rtol=1e-5), (loss_rg, ref2)

    print("KERNEL_OK")
</pallas_src>

<mosaic_0001>
module attributes {stable_mosaic.version = 11 : i64} {
  func.func @_huber_single_kernel(%arg0: i32, %arg1: memref<16x128xf32, #tpu.memory_space<vmem>>, %arg2: memref<16x128xf32, #tpu.memory_space<vmem>>, %arg3: memref<1x1xf32, #tpu.memory_space<vmem>>) attributes {dimension_semantics = [#tpu.dimension_semantics<arbitrary>], iteration_bounds = array<i64: 1>, scalar_prefetch = 0 : i64, scratch_operands = 0 : i64, tpu.core_type = #tpu.core_type<tc>, window_params = [{pipeline_mode = #tpu.pipeline_mode<synchronous>, transform_indices = @transform_0, window_bounds = array<i64: 16, 128>}, {pipeline_mode = #tpu.pipeline_mode<synchronous>, transform_indices = @transform_1, window_bounds = array<i64: 16, 128>}, {pipeline_mode = #tpu.pipeline_mode<synchronous>, transform_indices = @transform_2, window_bounds = array<i64: 1, 1>}]} {
    %c0 = arith.constant 0 : index
    %c0_0 = arith.constant 0 : index
    %0 = vector.load %arg1[%c0, %c0_0] : memref<16x128xf32, #tpu.memory_space<vmem>>, vector<16x128xf32>
    %c0_1 = arith.constant 0 : index
    %c0_2 = arith.constant 0 : index
    %1 = vector.load %arg2[%c0_1, %c0_2] : memref<16x128xf32, #tpu.memory_space<vmem>>, vector<16x128xf32>
    %2 = arith.subf %0, %1 : vector<16x128xf32>
    %3 = math.absf %2 : vector<16x128xf32>
    %cst = arith.constant 1.000000e+00 : f32
    %4 = vector.broadcast %cst : f32 to vector<16x128xf32>
    %5 = arith.minimumf %3, %4 : vector<16x128xf32>
    %6 = arith.subf %3, %5 : vector<16x128xf32>
    %cst_3 = arith.constant 5.000000e-01 : f32
    %7 = vector.broadcast %cst_3 : f32 to vector<16x128xf32>
    %8 = arith.mulf %7, %5 : vector<16x128xf32>
    %9 = arith.mulf %8, %5 : vector<16x128xf32>
    %cst_4 = arith.constant 1.000000e+00 : f32
    %10 = vector.broadcast %cst_4 : f32 to vector<16x128xf32>
    %11 = arith.mulf %10, %6 : vector<16x128xf32>
    %12 = arith.addf %9, %11 : vector<16x128xf32>
    %13 = vector.shape_cast %12 : vector<16x128xf32> to vector<1x16x128xf32>
    %cst_5 = arith.constant dense<0.000000e+00> : vector<1xf32>
    %14 = vector.multi_reduction <add>, %13, %cst_5 [1, 2] : vector<1x16x128xf32> to vector<1xf32>
    %15 = vector.shape_cast %14 : vector<1xf32> to vector<1x1x1xf32>
    %16 = vector.extract %15[0, 0, 0] : f32 from vector<1x1x1xf32>
    %cst_6 = arith.constant 2.048000e+03 : f32
    %17 = arith.divf %16, %cst_6 : f32
    %18 = vector.broadcast %17 : f32 to vector<1x1xf32>
    %c0_7 = arith.constant 0 : index
    %c0_8 = arith.constant 0 : index
    %19 = vector.load %arg3[%c0_7, %c0_8] : memref<1x1xf32, #tpu.memory_space<vmem>>, vector<1x1xf32>
    tpu.vector_store %arg3[%c0_7, %c0_8], %18 {strides = array<i32>} : memref<1x1xf32, #tpu.memory_space<vmem>>, vector<1x1xf32>,
    return
  }
  func.func @transform_0(%arg0: i32) -> (i32, i32) {
    %c0_i32 = arith.constant 0 : i32
    %c0_i32_0 = arith.constant 0 : i32
    %c0_i32_1 = arith.constant 0 : i32
    return %c0_i32, %c0_i32_0 : i32, i32
  }
  func.func @transform_1(%arg0: i32) -> (i32, i32) {
    %c0_i32 = arith.constant 0 : i32
    %c0_i32_0 = arith.constant 0 : i32
    %c0_i32_1 = arith.constant 0 : i32
    return %c0_i32, %c0_i32_0 : i32, i32
  }
  func.func @transform_2(%arg0: i32) -> (i32, i32) {
    %c0_i32 = arith.constant 0 : i32
    %c0_i32_0 = arith.constant 0 : i32
    %c0_i32_1 = arith.constant 0 : i32
    return %c0_i32, %c0_i32_0 : i32, i32
  }
}

</mosaic_0001>

<llo_original>
// kernel: tpu_custom_call.1
$region0: #{tpu_custom_call.1}
  #allocation0 [shape = 'u32[]', space=smem, size = 0x4, offset = 0x4, fixed_abs, tag = 'smem constant byte address 0x4 - core index']
  #allocation1 [shape = 'u32[72,128]{1,0:T(1,128)}', space=vmem, size = 0x9000, scoped, tag = 'internal scratch']
  %s0 = inlined_call_operand.hbm [shape: f32[16,128], index: 0, kind: input, shape index: {}]
  %s1 = inlined_call_operand.hbm [shape: f32[16,128], index: 1, kind: input, shape index: {}]
  %s2 = inlined_call_operand.hbm [shape: f32[1,1], index: 2, kind: output, shape index: {}]
  %s3 = sld [smem:[#allocation0]]
  $region26: #{tpu_custom_call.1} parent=0
    _
  %s5 = ssub.s32 1, %s3
  %s6 = scalar_select 0, %s5, %s3
  $region1: #{tpu_custom_call.1} parent=0
    #allocation2 [shape = 'u8[8192]{0}', space=vmem, size = 0x2000, scoped, tag = 'input window, operand 0, single buffered']
    #allocation3 [shape = 's32[1]{0}', space=sflag, size = 0x4, scoped, tag = 'scoped memory for tpu_custom_call.1']
    #allocation4 [shape = 's32[1]{0}', space=sflag, size = 0x4, scoped, tag = 'scoped memory for tpu_custom_call.1']
    #allocation5 [shape = 'u8[8192]{0}', space=vmem, size = 0x2000, scoped, tag = 'input window, operand 1, single buffered']
    #allocation6 [shape = 's32[1]{0}', space=sflag, size = 0x4, scoped, tag = 'scoped memory for tpu_custom_call.1']
    #allocation7 [shape = 'u8[512]{0}', space=vmem, size = 0x400, scoped, tag = 'output window, operand 0, single buffered']
    %7 = vsyncpa [#allocation3], 0
    %8 = vsyncpa [#allocation6], 0
    %9 = vsyncpa [#allocation4], 0
    // Predicated region
    $region2: #{tpu_custom_call.1} parent=1 // pred_check
      _
    $region3: #{tpu_custom_call.1} parent=1 // pred_check_branch
      %11 = sbr.rel (0) target = $region5
    $region4: #{tpu_custom_call.1} parent=1 // pred_region
      %13 = vsyncadd [#allocation3], 0
      %s14 = sshll.u32 %s0, 4
      %s15 = int_to_ptr.hbm [resolvable:$true] %s14
      %s16 = sshll.u32 [#allocation2], 4
      %s17 = int_to_ptr.vmem [resolvable:$true] %s16
      %22 = dma.hbm_to_vmem [thread:$0]  %s15, 256, %s17, [#allocation3], 128, 128, 8
    $region5: #{tpu_custom_call.1} parent=1 // pred_fallthru
      _
    // Predicated region
    $region6: #{tpu_custom_call.1} parent=1 // pred_check
      _
    $region7: #{tpu_custom_call.1} parent=1 // pred_check_branch
      %24 = sbr.rel (0) target = $region9
    $region8: #{tpu_custom_call.1} parent=1 // pred_region
      %26 = vsyncadd [#allocation6], 0
      %s27 = sshll.u32 %s1, 4
      %s28 = int_to_ptr.hbm [resolvable:$true] %s27
      %s29 = sshll.u32 [#allocation5], 4
      %s30 = int_to_ptr.vmem [resolvable:$true] %s29
      %35 = dma.hbm_to_vmem [thread:$0]  %s28, 256, %s30, [#allocation6], 128, 128, 8
    $region9: #{tpu_custom_call.1} parent=1 // pred_fallthru
      _
    // Predicated region
    $region10: #{tpu_custom_call.1} parent=1 // pred_check
      _
    $region11: #{tpu_custom_call.1} parent=1 // pred_check_branch
      %37 = sbr.rel (0) target = $region13
    $region12: #{tpu_custom_call.1} parent=1 // pred_region
      %39 = dma.done [#allocation3], 256
    $region13: #{tpu_custom_call.1} parent=1 // pred_fallthru
      _
    // Predicated region
    $region14: #{tpu_custom_call.1} parent=1 // pred_check
      _
    $region15: #{tpu_custom_call.1} parent=1 // pred_check_branch
      %41 = sbr.rel (0) target = $region17
    $region16: #{tpu_custom_call.1} parent=1 // pred_region
      %43 = dma.done [#allocation6], 256
    $region17: #{tpu_custom_call.1} parent=1 // pred_fallthru
      _
    %v44 = vld [vmem:[#allocation2] sm:$0xff]
    %v45 = vld [vmem:[#allocation2 + $0x8] sm:$0xff]
    %v46 = vld [vmem:[#allocation5] sm:$0xff]
    %v47 = vld [vmem:[#allocation5 + $0x8] sm:$0xff]
    %v48 = vsub.f32 %v44, %v46
    %v49 = vsub.f32 %v45, %v47
    %v50 = vand.u32 2147483647, %v48
    %v51 = vand.u32 2147483647, %v49
    %v52 = vmin.f32 %v50, 1.0
    %v53 = vmin.f32 %v51, 1.0
    %v54 = vsub.f32 %v50, %v52
    %v55 = vsub.f32 %v51, %v53
    %v56 = vmul.f32 %v52, 0.5
    %v57 = vmul.f32 %v53, 0.5
    %v58 = vmul.f32 %v56, %v52
    %v59 = vmul.f32 %v57, %v53
    %v60 = vadd.f32 %v58, %v54
    %v61 = vadd.f32 %v59, %v55
    %v62 = vadd.f32 %v60, %v61
    %63 = vadd.xlane.f32.xlu0 %v62
    %v64 = vpop.xlane.xlu0 %63
    %v65 = vrot.slane %v64, 4
    %v66 = vadd.f32 %v64, %v65
    %v67 = vrot.slane %v66, 2
    %v68 = vadd.f32 %v66, %v67
    %v69 = vrot.slane %v68, 1
    %v70 = vadd.f32 %v68, %v69
    %s71 = vtos %v70
    %v72 = vrcp.pop 2048.0
    %v73 = vmul.f32 2048.0, %v72
    %v74 = vsub.f32 1.0, %v73
    %v75 = vmul.f32 %v72, %v74
    %v76 = vadd.f32 %v72, %v75
    %vm77 = vweird.f32 %v72
    %v78 = vsel %vm77, %v72, %v76
    %s79 = vtos %v78
    %s80 = smul.f32 %s71, %s79
    %v81 = vstv %s80
    %vm82 = vcmask 0
    %83 = vst.msk [vmem:[#allocation7] sm:$0x1] %vm82, %v81
    // Predicated region
    $region18: #{tpu_custom_call.1} parent=1 // pred_check
      _
    $region19: #{tpu_custom_call.1} parent=1 // pred_check_branch
      %85 = sbr.rel (0) target = $region21
    $region20: #{tpu_custom_call.1} parent=1 // pred_region
      %87 = vsyncadd [#allocation4], 0
      %s89 = sshll.u32 [#allocation7], 4
      %s90 = int_to_ptr.vmem [resolvable:$true] %s89
      %s91 = sshll.u32 %s2, 4
      %s92 = int_to_ptr.hbm [resolvable:$true] %s91
      %94 = dma.vmem_to_hbm [thread:$0]  %s90, 16, %s92, [#allocation4]
    $region21: #{tpu_custom_call.1} parent=1 // pred_fallthru
      _
    // Predicated region
    $region22: #{tpu_custom_call.1} parent=1 // pred_check
      _
    $region23: #{tpu_custom_call.1} parent=1 // pred_check_branch
      %96 = sbr.rel (0) target = $region25
    $region24: #{tpu_custom_call.1} parent=1 // pred_region
      %98 = dma.done [#allocation4], 16
    $region25: #{tpu_custom_call.1} parent=1 // pred_fallthru
      _
    %99 = vsyncpa [#allocation3], 1
    %100 = vsyncpa [#allocation6], 1
    %101 = vsyncpa [#allocation4], 1

</llo_original>
